<compile_context>
chip_gen: v5e
topology: v5e:2x2
jax: 0.10.0
libtpu: 0.0.40
codegen_flags: <defaults>
</compile_context>

<pallas_src>
import math

import jax
import jax.numpy as jnp
from jax.experimental import pallas as pl
from jax.experimental.pallas import tpu as pltpu


# ----------------------- deterministic "ModelParams" -----------------------
RBF_CUTOFF_LOWER = 0.0
RBF_CUTOFF_UPPER = 5.0
NUM_RBF = 64


def initial_params(cutoff_lower=RBF_CUTOFF_LOWER,
                   cutoff_upper=RBF_CUTOFF_UPPER,
                   num_rbf=NUM_RBF):
    offset = jnp.linspace(cutoff_lower, cutoff_upper, num_rbf, dtype=jnp.float32)
    coeff = -0.5 / (offset[1] - offset[0]) ** 2
    return offset, coeff


def _round_up(x, m):
    return ((x + m - 1) // m) * m


def _default_max_block_rows():
    # 8192 rows -> 4 MiB f32 output block per buffer; safe in v6e's 32 MiB
    # scoped-VMEM default.  4096 rows (-> 2 MiB, ~8 MiB total double-buffered)
    # is safe under every scoped default incl. v5e (16 MiB) and v7x (32 MiB).
    try:
        kind = jax.devices()[0].device_kind.lower()
    except Exception:
        return 4096
    if "v6" in kind:
        return 8192
    return 4096


def _choose_block_rows(rows, max_block_rows):
    """Multiple-of-8 block rows, near-equal blocks, even #steps when possible
    (balanced dual-TensorCore split on v7x via the 'parallel' grid axis)."""
    n_steps = pl.cdiv(rows, max_block_rows)
    if rows >= 32:
        n_steps = max(2, n_steps)
        if n_steps % 2:
            n_steps += 1
    br = _round_up(pl.cdiv(rows, n_steps), 8)
    br = min(br, max_block_rows)
    if br >= rows:
        br = rows                      # single block == full array: always legal
    return br


# --------------------------------- kernel ----------------------------------
def _make_kernel(pack, num_rbf):
    lane_width = pack * num_rbf

    def kernel(coeff_ref, dist_ref, offset_ref, out_ref):
        coeff = coeff_ref[0, 0]                      # SMEM scalar
        off = offset_ref[...]                        # (1, lane_width): offsets tiled `pack` times
        d = dist_ref[...]                            # (br, pack) packed distances
        br = d.shape[0]

        # Lane-dense distance operand: lane j carries d[:, j // num_rbf], so a
        # single full-128-lane sub/mul/mul/exp covers `pack` distances per row.
        d_b = jnp.broadcast_to(d[:, 0:1], (br, lane_width))
        if pack > 1:
            lane = jax.lax.broadcasted_iota(jnp.int32, (br, lane_width), 1)
            for p in range(1, pack):
                dp = jnp.broadcast_to(d[:, p:p + 1], (br, lane_width))
                d_b = jnp.where(lane >= p * num_rbf, dp, d_b)

        diff = d_b - off
        out_ref[...] = jnp.exp(coeff * (diff * diff)).astype(out_ref.dtype)

    return kernel


# -------------------------------- wrapper -----------------------------------
def gaussian_smearing(dist, offset, coeff, *, max_block_rows=None,
                      out_dtype=jnp.float32):
    """dist: float array of any shape; returns dist.shape + (num_rbf,)."""
    orig_shape = dist.shape
    num_rbf = int(offset.shape[0])
    n = int(math.prod(orig_shape)) if orig_shape else 1

    if n == 0:
        return jnp.zeros(orig_shape + (num_rbf,), out_dtype)

    if max_block_rows is None:
        max_block_rows = _default_max_block_rows()

    # Lane packing: pack consecutive distances per output row so the last dim
    # is a full multiple of 128 lanes (unmasked stores, full EUP utilization).
    if num_rbf % 128 == 0:
        pack = 1
    elif 128 % num_rbf == 0:
        pack = 128 // num_rbf
    else:
        pack = 1
        # TODO(synk): pad offsets up to a 128-divisible lane width (and drop
        # dummy columns in the consumer) when num_rbf does not divide 128.
    lane_width = pack * num_rbf

    dist_flat = jnp.reshape(dist, (n,)).astype(jnp.float32)
    n_pad = _round_up(n, pack)                 # pad input by < pack elements
    if n_pad != n:
        dist_flat = jnp.pad(dist_flat, (0, n_pad - n))
    rows = n_pad // pack
    # Row-major: row r = [dist[r*pack], ..., dist[r*pack + pack - 1]], so the
    # (rows, lane_width) output reshaped to (rows*pack, num_rbf) is bit-identical.
    dist_2d = dist_flat.reshape(rows, pack)

    offset_tiled = jnp.tile(offset.astype(jnp.float32).reshape(1, num_rbf),
                            (1, pack))                      # (1, lane_width)
    coeff_2d = jnp.reshape(coeff, (1, 1)).astype(jnp.float32)

    br = _choose_block_rows(rows, max_block_rows)
    grid = (pl.cdiv(rows, br),)                # ragged last block is masked

    out_bytes = rows * lane_width * jnp.dtype(out_dtype).itemsize
    cost = pl.CostEstimate(
        flops=4 * rows * lane_width,
        transcendentals=rows * lane_width,
        bytes_accessed=4 * n_pad + 4 * lane_width + out_bytes,
    )

    out = pl.pallas_call(
        _make_kernel(pack, num_rbf),
        out_shape=jax.ShapeDtypeStruct((rows, lane_width), out_dtype),
        grid_spec=pltpu.PrefetchScalarGridSpec(
            num_scalar_prefetch=0,
            grid=grid,
            in_specs=[
                pl.BlockSpec(memory_space=pltpu.MemorySpace.SMEM),   # coeff (1,1)
                pl.BlockSpec((br, pack), lambda i: (i, 0)),          # packed dists
                pl.BlockSpec((1, lane_width), lambda i: (0, 0)),     # tiled offsets
            ],
            out_specs=pl.BlockSpec((br, lane_width), lambda i: (i, 0)),
        ),
        compiler_params=pltpu.CompilerParams(
            dimension_semantics=("parallel",)),
        cost_estimate=cost,
    )(coeff_2d, dist_2d, offset_tiled)

    # (rows, pack*num_rbf) row-major == (rows*pack, num_rbf): free reshape.
    out = out.reshape(rows * pack, num_rbf)
    if n_pad != n:
        # TODO(synk): prefer pack-multiple distance counts upstream (or slice
        # lazily in the consumer); this slice re-materializes the output.
        out = out[:n]
    return out.reshape(orig_shape + (num_rbf,))


# ------------------------------- reference ---------------------------------
def gaussian_smearing_ref(dist, offset, coeff):
    d = dist[..., None] - offset
    return jnp.exp(coeff * d * d)


if __name__ == "__main__":
    key = jax.random.PRNGKey(0)
    offset, coeff = initial_params()

    k1, k2 = jax.random.split(key)
    # typical inputs: per-edge distance vectors
    dist_even = jax.random.uniform(k1, (500,), dtype=jnp.float32,
                                   minval=RBF_CUTOFF_LOWER, maxval=RBF_CUTOFF_UPPER)
    dist_ragged = jax.random.uniform(k2, (3, 111), dtype=jnp.float32,
                                     minval=RBF_CUTOFF_LOWER, maxval=RBF_CUTOFF_UPPER)

    for dist in (dist_even, dist_ragged):
        out = jax.block_until_ready(gaussian_smearing(dist, offset, coeff))
        ref = gaussian_smearing_ref(dist, offset, coeff)
        assert out.shape == dist.shape + (NUM_RBF,), out.shape
        assert jnp.allclose(out, ref, atol=1e-5, rtol=1e-5), \
            float(jnp.max(jnp.abs(out - ref)))

    print("KERNEL_OK")
</pallas_src>

<mosaic_0001>
module attributes {stable_mosaic.version = 11 : i64} {
  func.func @kernel(%arg0: i32, %arg1: memref<1x1xf32, #tpu.memory_space<smem>>, %arg2: memref<128x2xf32, #tpu.memory_space<vmem>>, %arg3: memref<1x128xf32, #tpu.memory_space<vmem>>, %arg4: memref<128x128xf32, #tpu.memory_space<vmem>>) attributes {dimension_semantics = [#tpu.dimension_semantics<parallel>], iteration_bounds = array<i64: 2>, scalar_prefetch = 0 : i64, scratch_operands = 0 : i64, tpu.core_type = #tpu.core_type<tc>, window_params = [{transform_indices = @transform_0, window_bounds = array<i64: 1, 1>}, {transform_indices = @transform_1, window_bounds = array<i64: 128, 2>}, {pipeline_mode = #tpu.pipeline_mode<synchronous>, transform_indices = @transform_2, window_bounds = array<i64: 1, 128>}, {transform_indices = @transform_3, window_bounds = array<i64: 128, 128>}]} {
    %c0 = arith.constant 0 : index
    %c0_0 = arith.constant 0 : index
    %0 = memref.load %arg1[%c0, %c0_0] : memref<1x1xf32, #tpu.memory_space<smem>>
    %c0_1 = arith.constant 0 : index
    %c0_2 = arith.constant 0 : index
    %1 = vector.load %arg3[%c0_1, %c0_2] : memref<1x128xf32, #tpu.memory_space<vmem>>, vector<1x128xf32>
    %c0_3 = arith.constant 0 : index
    %c0_4 = arith.constant 0 : index
    %2 = vector.load %arg2[%c0_3, %c0_4] : memref<128x2xf32, #tpu.memory_space<vmem>>, vector<128x2xf32>
    %3 = vector.extract_strided_slice %2 {offsets = [0, 0], sizes = [128, 1], strides = [1, 1]} : vector<128x2xf32> to vector<128x1xf32>
    %4 = vector.shape_cast %3 : vector<128x1xf32> to vector<128x1xf32>
    %5 = vector.broadcast %4 : vector<128x1xf32> to vector<128x128xf32>
    %6 = tpu.iota {dimensions = array<i32: 1>} : vector<128x128xi32>
    %7 = vector.extract_strided_slice %2 {offsets = [0, 1], sizes = [128, 1], strides = [1, 1]} : vector<128x2xf32> to vector<128x1xf32>
    %8 = vector.shape_cast %7 : vector<128x1xf32> to vector<128x1xf32>
    %9 = vector.broadcast %8 : vector<128x1xf32> to vector<128x128xf32>
    %c64_i32 = arith.constant 64 : i32
    %10 = vector.broadcast %c64_i32 : i32 to vector<128x128xi32>
    %11 = arith.cmpi sge, %6, %10 : vector<128x128xi32>
    %12 = arith.select %11, %9, %5 : vector<128x128xi1>, vector<128x128xf32>
    %13 = vector.broadcast %1 : vector<1x128xf32> to vector<128x128xf32>
    %14 = arith.subf %12, %13 : vector<128x128xf32>
    %15 = arith.mulf %14, %14 : vector<128x128xf32>
    %16 = vector.broadcast %0 : f32 to vector<128x128xf32>
    %17 = arith.mulf %16, %15 : vector<128x128xf32>
    %18 = math.exp %17 : vector<128x128xf32>
    %c0_5 = arith.constant 0 : index
    %c0_6 = arith.constant 0 : index
    %19 = vector.load %arg4[%c0_5, %c0_6] : memref<128x128xf32, #tpu.memory_space<vmem>>, vector<128x128xf32>
    tpu.vector_store %arg4[%c0_5, %c0_6], %18 {strides = array<i32>} : memref<128x128xf32, #tpu.memory_space<vmem>>, vector<128x128xf32>,
    return
  }
  func.func @transform_0(%arg0: i32) -> (i32, i32) {
    %c0_i32 = arith.constant 0 : i32
    %c0_i32_0 = arith.constant 0 : i32
    %c0_i32_1 = arith.constant 0 : i32
    return %c0_i32, %c0_i32_0 : i32, i32
  }
  func.func @transform_1(%arg0: i32) -> (i32, i32) {
    %c0_i32 = arith.constant 0 : i32
    %c0_i32_0 = arith.constant 0 : i32
    return %arg0, %c0_i32 : i32, i32
  }
  func.func @transform_2(%arg0: i32) -> (i32, i32) {
    %c0_i32 = arith.constant 0 : i32
    %c0_i32_0 = arith.constant 0 : i32
    %c0_i32_1 = arith.constant 0 : i32
    return %c0_i32, %c0_i32_0 : i32, i32
  }
  func.func @transform_3(%arg0: i32) -> (i32, i32) {
    %c0_i32 = arith.constant 0 : i32
    %c0_i32_0 = arith.constant 0 : i32
    return %arg0, %c0_i32 : i32, i32
  }
}

</mosaic_0001>

<llo_original>
// kernel: tpu_custom_call.1
$region0: #{tpu_custom_call.1}
  #allocation0 [shape = 'u32[]', space=smem, size = 0x4, offset = 0x4, fixed_abs, tag = 'smem constant byte address 0x4 - core index']
  #allocation1 [shape = 'u32[72,128]{1,0:T(1,128)}', space=vmem, size = 0x9000, scoped, tag = 'internal scratch']
  #allocation2 [shape = 'f32[1,1]{1,0:T(1,128)S(6)}', space=smem, size = 0x200, scoped, tag = 'scoped memory for tpu_custom_call.1']
  %s0 = inlined_call_operand.<no memory space> [shape: f32[1,1], index: 0, kind: input, shape index: {}]
  %s1 = inlined_call_operand.vmem [shape: f32[250,2], index: 1, kind: input, shape index: {}]
  %s2 = inlined_call_operand.vmem [shape: f32[1,128], index: 2, kind: input, shape index: {}]
  %s3 = inlined_call_operand.hbm [shape: f32[250,128], index: 3, kind: output, shape index: {}]
  %s4 = sld [smem:[#allocation0]]
  $region45: #{tpu_custom_call.1} parent=0
    _
  %s6 = ssub.s32 1, %s4
  %s7 = scalar_select 0, %s6, %s4
  %8 = sst [smem:[#allocation2]] %s0
  $region1: #{tpu_custom_call.1} parent=0
    #allocation3 [shape = 'u8[131072]{0}', space=vmem, size = 0x20000, scoped, tag = 'output window, operand 0']
    #allocation4 [shape = 's32[2]{0}', space=sflag, size = 0x8, scoped, tag = 'scoped memory for tpu_custom_call.1']
    %9 = vsyncpa [#allocation4], 0
    %s10 = scalar_lea.sflag [#allocation4], 1
    %11 = vsyncpa %s10, 0
    loop: start=0, step=1, limit=4
    $region2: #{tpu_custom_call.1} parent=1 // loop_pre_header
      _
    $region3: #{tpu_custom_call.1} parent=1 // loop_header
      %s13 = sphi 0, %s17
      %p14 = scmp.ge.s32.totalorder %s13, 4
      %s21 = sphi 0, %s21
      %s23 = sphi 0, %s21
      %s24 = sphi 0, %s23
      %s38 = sphi 0, %s24
      %s44 = sphi 0, %s46
      %s47 = sphi 0, %s44
      %s48 = sphi 0, %s47
      %s64 = sphi 0, %s48
      %s68 = sphi 0, %s68
      %s70 = sphi 0, %s68
      %s71 = sphi 0, %s70
      %s85 = sphi 0, %s71
      %s91 = sphi 0, %s93
      %s94 = sphi 0, %s91
      %s95 = sphi 0, %s94
      %s111 = sphi 0, %s95
    $region4: #{tpu_custom_call.1} parent=1 // loop_header_branch
      %16 = sbr.rel (%p14) target = $region8
    $region5: #{tpu_custom_call.1} parent=1 // loop_body
      %s18 = ssub.s32 %s13, 1
      %s19 = ssub.s32 %s13, 2
      %s20 = sadd.s32 %s13, 1
      %s22 = sadd.s32 %s21, 1
      %p25 = scmp.eq.s32.totalorder %s13, 1
      %p26 = scmp.ne.s32.totalorder %s21, %s23
      %p27 = scmp.eq.s32.totalorder %s13, 0
      %p28 = por %p26, %p27
      %p29 = scmp.ne.s32.totalorder %s21, %s23
      %p30 = scmp.eq.s32.totalorder %s18, 1
      %p31 = por %p29, %p30
      %p32 = scmp.ne.s32.totalorder %s23, %s24
      %p33 = scmp.eq.s32.totalorder %s18, 0
      %p34 = por %p32, %p33
      %p35 = scmp.ne.s32.totalorder %s23, %s24
      %p36 = scmp.eq.s32.totalorder %s19, 1
      %p37 = por %p35, %p36
      %p39 = scmp.ne.s32.totalorder %s24, %s38
      %p40 = scmp.eq.s32.totalorder %s19, 0
      %p41 = por %p39, %p40
      %s42 = ssub.s32 %s13, %s20
      %p43 = scmp.eq.s32.totalorder %s42, 0
      %s45 = sadd.s32 %s44, 1
      %s46 = scalar_select %p43, %s44, %s45
      %p49 = pneg %p43
      %p50 = scmp.eq.s32.totalorder %s13, 1
      %p51 = por %p49, %p50
      %p52 = scmp.ne.s32.totalorder %s44, %s47
      %p53 = scmp.eq.s32.totalorder %s13, 0
      %p54 = por %p52, %p53
      %p55 = scmp.ne.s32.totalorder %s44, %s47
      %p56 = scmp.eq.s32.totalorder %s18, 1
      %p57 = por %p55, %p56
      %p58 = scmp.ne.s32.totalorder %s47, %s48
      %p59 = scmp.eq.s32.totalorder %s18, 0
      %p60 = por %p58, %p59
      %p61 = scmp.ne.s32.totalorder %s47, %s48
      %p62 = scmp.eq.s32.totalorder %s19, 1
      %p63 = por %p61, %p62
      %p65 = scmp.ne.s32.totalorder %s48, %s64
      %p66 = scmp.eq.s32.totalorder %s19, 0
      %p67 = por %p65, %p66
      %s69 = sadd.s32 %s68, 1
      %p72 = scmp.eq.s32.totalorder %s13, 1
      %p73 = scmp.ne.s32.totalorder %s68, %s70
      %p74 = scmp.eq.s32.totalorder %s13, 0
      %p75 = por %p73, %p74
      %p76 = scmp.ne.s32.totalorder %s68, %s70
      %p77 = scmp.eq.s32.totalorder %s18, 1
      %p78 = por %p76, %p77
      %p79 = scmp.ne.s32.totalorder %s70, %s71
      %p80 = scmp.eq.s32.totalorder %s18, 0
      %p81 = por %p79, %p80
      %p82 = scmp.ne.s32.totalorder %s70, %s71
      %p83 = scmp.eq.s32.totalorder %s19, 1
      %p84 = por %p82, %p83
      %p86 = scmp.ne.s32.totalorder %s71, %s85
      %p87 = scmp.eq.s32.totalorder %s19, 0
      %p88 = por %p86, %p87
      %s89 = ssub.s32 %s13, %s20
      %p90 = scmp.eq.s32.totalorder %s89, 0
      %s92 = sadd.s32 %s91, 1
      %s93 = scalar_select %p90, %s91, %s92
      %p96 = pneg %p90
      %p97 = scmp.eq.s32.totalorder %s13, 1
      %p98 = por %p96, %p97
      %p99 = scmp.ne.s32.totalorder %s91, %s94
      %p100 = scmp.eq.s32.totalorder %s13, 0
      %p101 = por %p99, %p100
      %p102 = scmp.ne.s32.totalorder %s91, %s94
      %p103 = scmp.eq.s32.totalorder %s18, 1
      %p104 = por %p102, %p103
      %p105 = scmp.ne.s32.totalorder %s94, %s95
      %p106 = scmp.eq.s32.totalorder %s18, 0
      %p107 = por %p105, %p106
      %p108 = scmp.ne.s32.totalorder %s94, %s95
      %p109 = scmp.eq.s32.totalorder %s19, 1
      %p110 = por %p108, %p109
      %p112 = scmp.ne.s32.totalorder %s95, %s111
      %p113 = scmp.eq.s32.totalorder %s19, 0
      %p114 = por %p112, %p113
      %p115 = scmp.le.s32.totalorder 1, %s13
      %p116 = scmp.lt.s32.totalorder %s13, 3
      %p117 = pnand %p115, %p116
      %p118 = pneg %p117
      // Predicated region
      $region9: #{tpu_custom_call.1} parent=5 // pred_check
        _
      $region10: #{tpu_custom_call.1} parent=5 // pred_check_branch
        %120 = sbr.rel (%p117) target = $region12
      $region11: #{tpu_custom_call.1} parent=5 // pred_region
        %s121 = ssub.s32 %s13, 1
        // Predicated region
        $region13: #{tpu_custom_call.1} parent=11 // pred_check
          %p122 = pneg %p34
        $region14: #{tpu_custom_call.1} parent=11 // pred_check_branch
          %124 = sbr.rel (%p122) target = $region16
        $region15: #{tpu_custom_call.1} parent=11 // pred_region
          _
        $region16: #{tpu_custom_call.1} parent=11 // pred_fallthru
          _
        // Predicated region
        $region17: #{tpu_custom_call.1} parent=11 // pred_check
          %p125 = pneg %p81
        $region18: #{tpu_custom_call.1} parent=11 // pred_check_branch
          %127 = sbr.rel (%p125) target = $region20
        $region19: #{tpu_custom_call.1} parent=11 // pred_region
          _
        $region20: #{tpu_custom_call.1} parent=11 // pred_fallthru
          _
      $region12: #{tpu_custom_call.1} parent=5 // pred_fallthru
        _
      %p128 = scmp.lt.s32.totalorder %s13, 2
      // Predicated region
      $region21: #{tpu_custom_call.1} parent=5 // pred_check
        %p129 = pneg %p128
      $region22: #{tpu_custom_call.1} parent=5 // pred_check_branch
        %131 = sbr.rel (%p129) target = $region24
      $region23: #{tpu_custom_call.1} parent=5 // pred_region
        // Predicated region
        $region25: #{tpu_custom_call.1} parent=23 // pred_check
          %p132 = pneg %p54
        $region26: #{tpu_custom_call.1} parent=23 // pred_check_branch
          %134 = sbr.rel (%p132) target = $region28
        $region27: #{tpu_custom_call.1} parent=23 // pred_region
          %s135 = smul.u32 16, %s13
          %p136 = scmp.lt.s32.totalorder %s135, 31
          %s137 = scalar_select %p136, %s135, 31
          %s138 = smul.addr %s137, 8
          %s139 = scalar_lea.vmem %s1, %s138
          %s140 = smul.u32 16, %s13
        $region28: #{tpu_custom_call.1} parent=23 // pred_fallthru
          _
      $region24: #{tpu_custom_call.1} parent=5 // pred_fallthru
        _
      %p141 = scmp.le.s32.totalorder 1, %s13
      %p142 = scmp.lt.s32.totalorder %s13, 3
      %p143 = pnand %p141, %p142
      %p144 = pneg %p143
      // Predicated region
      $region29: #{tpu_custom_call.1} parent=5 // pred_check
        _
      $region30: #{tpu_custom_call.1} parent=5 // pred_check_branch
        %146 = sbr.rel (%p143) target = $region32
      $region31: #{tpu_custom_call.1} parent=5 // pred_region
        %s147 = ssub.s32 %s13, 1
        %p148 = pneg %p34
        %p149 = pneg %p31
        %s150 = smul.u32 16, %s18
        %p151 = scmp.lt.s32.totalorder %s150, 31
        %s152 = scalar_select %p151, %s150, 31
        %s153 = smul.addr %s152, 8
        %s154 = scalar_lea.vmem %s1, %s153
        %p155 = pneg %p60
        %p156 = pneg %p57
        %p157 = pneg %p81
        %p158 = pneg %p78
        %p159 = pneg %p107
        %p160 = pneg %p104
        %s161 = sand.u32 %s94, 1
        %s162 = scalar_lea.sflag [#allocation4], %s161
        %s163 = sand.u32 %s94, 1
        %s164 = smul.addr %s163, 128
        %s165 = scalar_lea.vmem [#allocation3], %s164
        %s166 = smul.u32 16, %s18
        %p167 = scmp.lt.s32.totalorder %s166, 31
        %s168 = scalar_select %p167, %s166, 31
        %s169 = smul.addr %s168, 8
        %s170 = scalar_lea.vmem %s1, %s169
        %s171 = smul.u32 16, %s18
        %s172 = smul.u32 16, %s18
        %s173 = sld [smem:[#allocation2]]
        %v174 = vld [vmem:[%s2] sm:$0x1]
        %v175 = vld [vmem:[%s170] sm:$0xff]
        %v176 = vld [vmem:[%s170 + $0x8] sm:$0xff]
        %v177 = vld [vmem:[%s170 + $0x10] sm:$0xff]
        %v178 = vld [vmem:[%s170 + $0x18] sm:$0xff]
        %v179 = vld [vmem:[%s170 + $0x20] sm:$0xff]
        %v180 = vld [vmem:[%s170 + $0x28] sm:$0xff]
        %v181 = vld [vmem:[%s170 + $0x30] sm:$0xff]
        %v182 = vld [vmem:[%s170 + $0x38] sm:$0xff]
        %v183 = vld [vmem:[%s170 + $0x40] sm:$0xff]
        %v184 = vld [vmem:[%s170 + $0x48] sm:$0xff]
        %v185 = vld [vmem:[%s170 + $0x50] sm:$0xff]
        %v186 = vld [vmem:[%s170 + $0x58] sm:$0xff]
        %v187 = vld [vmem:[%s170 + $0x60] sm:$0xff]
        %v188 = vld [vmem:[%s170 + $0x68] sm:$0xff]
        %v189 = vld [vmem:[%s170 + $0x70] sm:$0xff]
        %v190 = vld [vmem:[%s170 + $0x78] sm:$0xff]
        %192 = vset.pattern.permute.xlu0 0
        %193 = vperm.xlu0 %192, %v175
        %v194 = vpop.permute.xlu0 %193
        %197 = vset.pattern.permute.xlu0 0
        %198 = vperm.xlu0 %197, %v176
        %v199 = vpop.permute.xlu0 %198
        %202 = vset.pattern.permute.xlu0 0
        %203 = vperm.xlu0 %202, %v177
        %v204 = vpop.permute.xlu0 %203
        %207 = vset.pattern.permute.xlu0 0
        %208 = vperm.xlu0 %207, %v178
        %v209 = vpop.permute.xlu0 %208
        %212 = vset.pattern.permute.xlu0 0
        %213 = vperm.xlu0 %212, %v179
        %v214 = vpop.permute.xlu0 %213
        %217 = vset.pattern.permute.xlu0 0
        %218 = vperm.xlu0 %217, %v180
        %v219 = vpop.permute.xlu0 %218
        %222 = vset.pattern.permute.xlu0 0
        %223 = vperm.xlu0 %222, %v181
        %v224 = vpop.permute.xlu0 %223
        %227 = vset.pattern.permute.xlu0 0
        %228 = vperm.xlu0 %227, %v182
        %v229 = vpop.permute.xlu0 %228
        %232 = vset.pattern.permute.xlu0 0
        %233 = vperm.xlu0 %232, %v183
        %v234 = vpop.permute.xlu0 %233
        %237 = vset.pattern.permute.xlu0 0
        %238 = vperm.xlu0 %237, %v184
        %v239 = vpop.permute.xlu0 %238
        %242 = vset.pattern.permute.xlu0 0
        %243 = vperm.xlu0 %242, %v185
        %v244 = vpop.permute.xlu0 %243
        %247 = vset.pattern.permute.xlu0 0
        %248 = vperm.xlu0 %247, %v186
        %v249 = vpop.permute.xlu0 %248
        %252 = vset.pattern.permute.xlu0 0
        %253 = vperm.xlu0 %252, %v187
        %v254 = vpop.permute.xlu0 %253
        %257 = vset.pattern.permute.xlu0 0
        %258 = vperm.xlu0 %257, %v188
        %v259 = vpop.permute.xlu0 %258
        %262 = vset.pattern.permute.xlu0 0
        %263 = vperm.xlu0 %262, %v189
        %v264 = vpop.permute.xlu0 %263
        %267 = vset.pattern.permute.xlu0 0
        %268 = vperm.xlu0 %267, %v190
        %v269 = vpop.permute.xlu0 %268
        %v271 = vlaneseq
        %v272 = vand.u32 %v271, 127
        %273 = vset.pattern.permute.xlu0 1
        %274 = vperm.xlu0 %273, %v175
        %v275 = vpop.permute.xlu0 %274
        %277 = vset.pattern.permute.xlu0 1
        %278 = vperm.xlu0 %277, %v176
        %v279 = vpop.permute.xlu0 %278
        %281 = vset.pattern.permute.xlu0 1
        %282 = vperm.xlu0 %281, %v177
        %v283 = vpop.permute.xlu0 %282
        %285 = vset.pattern.permute.xlu0 1
        %286 = vperm.xlu0 %285, %v178
        %v287 = vpop.permute.xlu0 %286
        %289 = vset.pattern.permute.xlu0 1
        %290 = vperm.xlu0 %289, %v179
        %v291 = vpop.permute.xlu0 %290
        %293 = vset.pattern.permute.xlu0 1
        %294 = vperm.xlu0 %293, %v180
        %v295 = vpop.permute.xlu0 %294
        %297 = vset.pattern.permute.xlu0 1
        %298 = vperm.xlu0 %297, %v181
        %v299 = vpop.permute.xlu0 %298
        %301 = vset.pattern.permute.xlu0 1
        %302 = vperm.xlu0 %301, %v182
        %v303 = vpop.permute.xlu0 %302
        %305 = vset.pattern.permute.xlu0 1
        %306 = vperm.xlu0 %305, %v183
        %v307 = vpop.permute.xlu0 %306
        %309 = vset.pattern.permute.xlu0 1
        %310 = vperm.xlu0 %309, %v184
        %v311 = vpop.permute.xlu0 %310
        %313 = vset.pattern.permute.xlu0 1
        %314 = vperm.xlu0 %313, %v185
        %v315 = vpop.permute.xlu0 %314
        %317 = vset.pattern.permute.xlu0 1
        %318 = vperm.xlu0 %317, %v186
        %v319 = vpop.permute.xlu0 %318
        %321 = vset.pattern.permute.xlu0 1
        %322 = vperm.xlu0 %321, %v187
        %v323 = vpop.permute.xlu0 %322
        %325 = vset.pattern.permute.xlu0 1
        %326 = vperm.xlu0 %325, %v188
        %v327 = vpop.permute.xlu0 %326
        %329 = vset.pattern.permute.xlu0 1
        %330 = vperm.xlu0 %329, %v189
        %v331 = vpop.permute.xlu0 %330
        %333 = vset.pattern.permute.xlu0 1
        %334 = vperm.xlu0 %333, %v190
        %v335 = vpop.permute.xlu0 %334
        %vm337 = vcmp.ge.s32.totalorder %v272, 64
        %v338 = vsel %vm337, %v275, %v194
        %v339 = vsel %vm337, %v279, %v199
        %v340 = vsel %vm337, %v283, %v204
        %v341 = vsel %vm337, %v287, %v209
        %v342 = vsel %vm337, %v291, %v214
        %v343 = vsel %vm337, %v295, %v219
        %v344 = vsel %vm337, %v299, %v224
        %v345 = vsel %vm337, %v303, %v229
        %v346 = vsel %vm337, %v307, %v234
        %v347 = vsel %vm337, %v311, %v239
        %v348 = vsel %vm337, %v315, %v244
        %v349 = vsel %vm337, %v319, %v249
        %v350 = vsel %vm337, %v323, %v254
        %v351 = vsel %vm337, %v327, %v259
        %v352 = vsel %vm337, %v331, %v264
        %v353 = vsel %vm337, %v335, %v269
        %v355 = vperm.slane %v174, 0
        %v357 = vsub.f32 %v338, %v355
        %v358 = vsub.f32 %v339, %v355
        %v359 = vsub.f32 %v340, %v355
        %v360 = vsub.f32 %v341, %v355
        %v361 = vsub.f32 %v342, %v355
        %v362 = vsub.f32 %v343, %v355
        %v363 = vsub.f32 %v344, %v355
        %v364 = vsub.f32 %v345, %v355
        %v365 = vsub.f32 %v346, %v355
        %v366 = vsub.f32 %v347, %v355
        %v367 = vsub.f32 %v348, %v355
        %v368 = vsub.f32 %v349, %v355
        %v369 = vsub.f32 %v350, %v355
        %v370 = vsub.f32 %v351, %v355
        %v371 = vsub.f32 %v352, %v355
        %v372 = vsub.f32 %v353, %v355
        %v373 = vmul.f32 %v357, %v357
        %v374 = vmul.f32 %v358, %v358
        %v375 = vmul.f32 %v359, %v359
        %v376 = vmul.f32 %v360, %v360
        %v377 = vmul.f32 %v361, %v361
        %v378 = vmul.f32 %v362, %v362
        %v379 = vmul.f32 %v363, %v363
        %v380 = vmul.f32 %v364, %v364
        %v381 = vmul.f32 %v365, %v365
        %v382 = vmul.f32 %v366, %v366
        %v383 = vmul.f32 %v367, %v367
        %v384 = vmul.f32 %v368, %v368
        %v385 = vmul.f32 %v369, %v369
        %v386 = vmul.f32 %v370, %v370
        %v387 = vmul.f32 %v371, %v371
        %v388 = vmul.f32 %v372, %v372
        %v389 = vstv %s173
        %v390 = vmul.f32 %v389, %v373
        %v391 = vmul.f32 %v389, %v374
        %v392 = vmul.f32 %v389, %v375
        %v393 = vmul.f32 %v389, %v376
        %v394 = vmul.f32 %v389, %v377
        %v395 = vmul.f32 %v389, %v378
        %v396 = vmul.f32 %v389, %v379
        %v397 = vmul.f32 %v389, %v380
        %v398 = vmul.f32 %v389, %v381
        %v399 = vmul.f32 %v389, %v382
        %v400 = vmul.f32 %v389, %v383
        %v401 = vmul.f32 %v389, %v384
        %v402 = vmul.f32 %v389, %v385
        %v403 = vmul.f32 %v389, %v386
        %v404 = vmul.f32 %v389, %v387
        %v405 = vmul.f32 %v389, %v388
        %v406 = vmul.f32 %v390, 1.442695
        %v407 = vpow.pop %v406
        %v408 = vmul.f32 %v391, 1.442695
        %v409 = vpow.pop %v408
        %v410 = vmul.f32 %v392, 1.442695
        %v411 = vpow.pop %v410
        %v412 = vmul.f32 %v393, 1.442695
        %v413 = vpow.pop %v412
        %v414 = vmul.f32 %v394, 1.442695
        %v415 = vpow.pop %v414
        %v416 = vmul.f32 %v395, 1.442695
        %v417 = vpow.pop %v416
        %v418 = vmul.f32 %v396, 1.442695
        %v419 = vpow.pop %v418
        %v420 = vmul.f32 %v397, 1.442695
        %v421 = vpow.pop %v420
        %v422 = vmul.f32 %v398, 1.442695
        %v423 = vpow.pop %v422
        %v424 = vmul.f32 %v399, 1.442695
        %v425 = vpow.pop %v424
        %v426 = vmul.f32 %v400, 1.442695
        %v427 = vpow.pop %v426
        %v428 = vmul.f32 %v401, 1.442695
        %v429 = vpow.pop %v428
        %v430 = vmul.f32 %v402, 1.442695
        %v431 = vpow.pop %v430
        %v432 = vmul.f32 %v403, 1.442695
        %v433 = vpow.pop %v432
        %v434 = vmul.f32 %v404, 1.442695
        %v435 = vpow.pop %v434
        %v436 = vmul.f32 %v405, 1.442695
        %v437 = vpow.pop %v436
        %438 = vst [vmem:[%s165] sm:$0xff] %v407
        %439 = vst [vmem:[%s165 + $0x8] sm:$0xff] %v409
        %440 = vst [vmem:[%s165 + $0x10] sm:$0xff] %v411
        %441 = vst [vmem:[%s165 + $0x18] sm:$0xff] %v413
        %442 = vst [vmem:[%s165 + $0x20] sm:$0xff] %v415
        %443 = vst [vmem:[%s165 + $0x28] sm:$0xff] %v417
        %444 = vst [vmem:[%s165 + $0x30] sm:$0xff] %v419
        %445 = vst [vmem:[%s165 + $0x38] sm:$0xff] %v421
        %446 = vst [vmem:[%s165 + $0x40] sm:$0xff] %v423
        %447 = vst [vmem:[%s165 + $0x48] sm:$0xff] %v425
        %448 = vst [vmem:[%s165 + $0x50] sm:$0xff] %v427
        %449 = vst [vmem:[%s165 + $0x58] sm:$0xff] %v429
        %450 = vst [vmem:[%s165 + $0x60] sm:$0xff] %v431
        %451 = vst [vmem:[%s165 + $0x68] sm:$0xff] %v433
        %452 = vst [vmem:[%s165 + $0x70] sm:$0xff] %v435
        %453 = vst [vmem:[%s165 + $0x78] sm:$0xff] %v437
        %s454 = sand.u32 %s94, 1
        %s455 = scalar_lea.sflag [#allocation4], %s454
        %s456 = sand.u32 %s94, 1
        %s457 = smul.addr %s456, 128
        %s458 = scalar_lea.vmem [#allocation3], %s457
        // Predicated region
        $region33: #{tpu_custom_call.1} parent=31 // pred_check
          %p459 = pneg %p104
        $region34: #{tpu_custom_call.1} parent=31 // pred_check_branch
          %461 = sbr.rel (%p459) target = $region36
        $region35: #{tpu_custom_call.1} parent=31 // pred_region
          %s462 = smul.u32 16, %s18
          %464 = vsyncadd %s455, 0
          %s465 = smul.addr %s462, 8
          %s466 = scalar_lea.hbm %s3, %s465
          %s467 = sshll.u32 %s458, 4
          %s468 = int_to_ptr.vmem [resolvable:$true] %s467
          %s469 = sshll.u32 %s466, 4
          %s470 = int_to_ptr.hbm [resolvable:$true] %s469
          %475 = dma.vmem_to_hbm [thread:$0]  %s468, 2048, %s470, %s455, 128, 128, 8
        $region36: #{tpu_custom_call.1} parent=31 // pred_fallthru
          _
      $region32: #{tpu_custom_call.1} parent=5 // pred_fallthru
        _
      %p476 = scmp.le.s32.totalorder 2, %s13
      // Predicated region
      $region37: #{tpu_custom_call.1} parent=5 // pred_check
        %p477 = pneg %p476
      $region38: #{tpu_custom_call.1} parent=5 // pred_check_branch
        %479 = sbr.rel (%p477) target = $region40
      $region39: #{tpu_custom_call.1} parent=5 // pred_region
        %s480 = ssub.s32 %s13, 2
        // Predicated region
        $region41: #{tpu_custom_call.1} parent=39 // pred_check
          %p481 = pneg %p110
        $region42: #{tpu_custom_call.1} parent=39 // pred_check_branch
          %483 = sbr.rel (%p481) target = $region44
        $region43: #{tpu_custom_call.1} parent=39 // pred_region
          %s484 = sand.u32 %s95, 1
          %s485 = scalar_lea.sflag [#allocation4], %s484
          %s486 = sand.u32 %s95, 1
          %s487 = smul.addr %s486, 128
          %s488 = scalar_lea.vmem [#allocation3], %s487
          %490 = dma.done %s485, 2048
        $region44: #{tpu_custom_call.1} parent=39 // pred_fallthru
          _
      $region40: #{tpu_custom_call.1} parent=5 // pred_fallthru
        _
    $region6: #{tpu_custom_call.1} parent=1 // loop_footer
      %s17 = sadd.s32 1, %s13
    $region7: #{tpu_custom_call.1} parent=1 // loop_footer_branch
      %12 = sbr.rel target = $region3
    $region8: #{tpu_custom_call.1} parent=1 // loop_exit
      _
    %491 = vsyncpa [#allocation4], 1
    %s492 = scalar_lea.sflag [#allocation4], 1
    %493 = vsyncpa %s492, 1

</llo_original>
